<compile_context>
chip_gen: v6e
topology: v6e:2x2x1
jax: 0.10.0
libtpu: 0.0.40
codegen_flags: <defaults>
</compile_context>

<pallas_src>
import functools

import jax
import jax.numpy as jnp
from jax.experimental import pallas as pl
from jax.experimental.pallas import tpu as pltpu


def _vae_kernel(
    x_ref, eps_ref,
    w1_ref, b1_ref, w2_ref, b2_ref,
    w3_ref, b3_ref,          # fused fc31 || fc32 : (in/4, 4), (1, 4)
    w4_ref, b4_ref,          # fc4 kept f32, used on the VPU
    w5_ref, b5_ref, w61_ref, b61_ref,
    zl_ref, recon_ref,
):
    f32 = jnp.float32
    bf16 = jnp.bfloat16

    # x arrives in its native f32 block; cast in-register (no extra HBM pass).
    x = x_ref[...].astype(bf16)                      # (TB, in)

    # ---------------- encode (bf16 MXU inputs, f32 accumulate) ----------------
    h1 = jnp.maximum(
        jnp.dot(x, w1_ref[...], preferred_element_type=f32) + b1_ref[...], 0.0)
    h2 = jnp.maximum(
        jnp.dot(h1.astype(bf16), w2_ref[...], preferred_element_type=f32)
        + b2_ref[...], 0.0)

    # fused fc31/fc32: one matmul, cols 0:2 = mu, 2:4 = logvar
    ml = jnp.dot(h2.astype(bf16), w3_ref[...], preferred_element_type=f32) + b3_ref[...]
    mu = ml[:, 0:2]
    logvar = ml[:, 2:4]

    # ---------------- reparametrize ----------------
    std = jnp.exp(0.5 * logvar)
    z = eps_ref[...] * std + mu                      # (TB, 2) f32

    # ---------------- label = softmax(z, dim=1), closed form for width 2 ------
    p0 = jax.nn.sigmoid(z[:, 0:1] - z[:, 1:2])       # EUP, no XLU reduce / divide

    # packed (TB, 4) output: [z | label], written with direct slice stores
    zl_ref[:, 0:2] = z
    zl_ref[:, 2:3] = p0
    zl_ref[:, 3:4] = 1.0 - p0

    # ---------------- decode ----------------
    # fc4 has contraction K=2 -> pure MXU fill/drain overhead; do it on the VPU
    # as a rank-2 update: z0 * w4[0,:] + z1 * w4[1,:] + b4
    d1 = jnp.maximum(
        z[:, 0:1] * w4_ref[0:1, :] + z[:, 1:2] * w4_ref[1:2, :] + b4_ref[...], 0.0)
    d2 = jnp.maximum(
        jnp.dot(d1.astype(bf16), w5_ref[...], preferred_element_type=f32)
        + b5_ref[...], 0.0)
    logits = jnp.dot(d2.astype(bf16), w61_ref[...], preferred_element_type=f32) + b61_ref[...]
    recon_ref[...] = jax.nn.sigmoid(logits).astype(recon_ref.dtype)


def _round_up(x, m):
    return ((x + m - 1) // m) * m


def _device_kind():
    try:
        return jax.devices()[0].device_kind.lower()
    except Exception:
        return ""


def _pick_tile(B, is_v7x):
    """Batch tile: big enough to sit near the HBM roofline (per-grid-step
    overhead ~0.35us), small enough for VMEM (v7x: 64 MiB vs 128 MiB).
    Always a multiple of 16 (bf16 recon block sublane tiling)."""
    cap = 1024 if is_v7x else 2048
    if B <= cap:
        bp = _round_up(max(B, 16), 16)
        tb = bp
        if is_v7x and bp % 32 == 0:
            tb = bp // 2                 # grid >= 2 -> both TensorCores get work
    else:
        # pick a tile in [cap/2, cap] (multiple of 16) that minimizes padding
        tb, best_pad = cap, None
        for t in range(cap, cap // 2 - 1, -16):
            pad = _round_up(B, t) - B
            if best_pad is None or pad < best_pad:
                tb, best_pad = t, pad
            if pad == 0:
                break
        bp = _round_up(B, tb)
    return tb, bp


@functools.partial(
    jax.jit,
    static_argnames=("xn", "yn", "tb", "bp", "recon_dtype", "is_v7x"))
def _vae_forward_impl(x, eps, params, *, xn, yn, tb, bp, recon_dtype, is_v7x):
    B = x.shape[0]
    in_size = xn * yn
    x_flat = x.reshape(B, in_size)       # row-major view, no data movement

    # pad only when the tile does not divide the batch (auto-tb avoids this)
    if bp != B:
        x_flat = jnp.pad(x_flat, ((0, bp - B), (0, 0)))
        eps = jnp.pad(eps, ((0, bp - B), (0, 0)))
    eps_f = eps.astype(jnp.float32)

    def wb(name, w_dtype=jnp.bfloat16):
        w, b = params[name]
        return w.astype(w_dtype), b.reshape(1, -1).astype(jnp.float32)

    w1, b1 = wb("fc1")
    w2, b2 = wb("fc2")
    # fuse fc31 / fc32 along the output axis -> one (in/4, 4) matmul
    w31, b31 = params["fc31"]
    w32, b32 = params["fc32"]
    w3 = jnp.concatenate([w31, w32], axis=1).astype(jnp.bfloat16)
    b3 = jnp.concatenate([b31, b32], axis=0).reshape(1, -1).astype(jnp.float32)
    w4, b4 = wb("fc4", jnp.float32)      # consumed on the VPU, keep f32
    w5, b5 = wb("fc5")
    w61, b61 = wb("fc61")

    args = [x_flat, eps_f, w1, b1, w2, b2, w3, b3, w4, b4, w5, b5, w61, b61]

    grid = (bp // tb,)

    def batch_spec(lane):
        # default 2-deep pipeline; sweep pl.Buffered(3) here only if a trace
        # shows the x-in / recon-out DMAs exposed at large tb.
        return pl.BlockSpec((tb, lane), lambda i: (i, 0))

    def const_spec(shape):
        # whole-array block, constant index -> stays VMEM resident across steps
        return pl.BlockSpec(shape, lambda i: (0, 0))

    in_specs = [batch_spec(in_size), batch_spec(2)]
    in_specs += [const_spec(a.shape) for a in args[2:]]

    out_shape = (
        jax.ShapeDtypeStruct((bp, 4), jnp.float32),        # [z | label]
        jax.ShapeDtypeStruct((bp, in_size), recon_dtype),  # decode(z)
    )
    out_specs = (batch_spec(4), batch_spec(in_size))

    # v7x: shard the batch axis across both TensorCores; elsewhere 1 TC/chip.
    if is_v7x and grid[0] >= 2 and grid[0] % 2 == 0:
        dim_sem = (getattr(pltpu, "CORE_PARALLEL", "parallel"),)
    else:
        dim_sem = ("parallel",)
    vmem_limit = (48 if is_v7x else 96) << 20   # below 64 / 128 MiB physical

    zl, recon = pl.pallas_call(
        _vae_kernel,
        out_shape=out_shape,
        grid=grid,
        in_specs=in_specs,
        out_specs=out_specs,
        compiler_params=pltpu.CompilerParams(
            dimension_semantics=dim_sem,
            vmem_limit_bytes=vmem_limit),
    )(*args)

    z = zl[:B, 0:2]
    label = zl[:B, 2:4]
    recon = recon[:B]
    return z, recon, label


def vae_forward(x, eps, params, *, xn, yn, tb=None, recon_dtype=jnp.bfloat16):
    """x: (B, xn, yn) float. eps: (B, 2) float.  Returns (z, recon, label).

    tb=None auto-picks the batch tile (up to 2048 on v5e/v6e, 1024 on v7x) and
    avoids padding when possible. recon is emitted in `recon_dtype` (default
    bf16; pass jnp.float32 if the consumer needs full precision).
    """
    B = x.shape[0]
    is_v7x = "v7" in _device_kind()
    if tb is None:
        tb, bp = _pick_tile(B, is_v7x)
    else:
        assert tb % 16 == 0, "tb must be a multiple of 16 (bf16 block tiling)"
        bp = _round_up(B, tb)
    return _vae_forward_impl(
        x, eps, params, xn=xn, yn=yn, tb=tb, bp=bp,
        recon_dtype=recon_dtype, is_v7x=is_v7x)


def init_params(key, xn, yn):
    """Deterministic init mimicking PyTorch Linear default (uniform +/- 1/sqrt(fan_in)).
    Weights are stored already transposed to (in, out)."""
    in_size = xn * yn
    dims = {
        "fc1": (in_size, in_size // 2),
        "fc2": (in_size // 2, in_size // 4),
        "fc31": (in_size // 4, 2),
        "fc32": (in_size // 4, 2),
        "fc4": (2, in_size // 4),
        "fc5": (in_size // 4, in_size // 2),
        "fc61": (in_size // 2, in_size),
    }
    params = {}
    for name, (fan_in, fan_out) in dims.items():
        key, kw, kb = jax.random.split(key, 3)
        bound = 1.0 / jnp.sqrt(jnp.float32(fan_in))
        w = jax.random.uniform(kw, (fan_in, fan_out), jnp.float32, -bound, bound)
        b = jax.random.uniform(kb, (fan_out,), jnp.float32, -bound, bound)
        params[name] = (w, b)
    return params


def vae_forward_ref(x, eps, params, xn, yn):
    """Pure-JAX f32 reference (matches the PyTorch module semantics)."""
    B = x.shape[0]
    xf = x.reshape(B, xn * yn)

    def lin(h, name):
        w, b = params[name]
        return h @ w + b

    h = jax.nn.relu(lin(xf, "fc1"))
    h = jax.nn.relu(lin(h, "fc2"))
    mu, logvar = lin(h, "fc31"), lin(h, "fc32")
    z = eps * jnp.exp(0.5 * logvar) + mu
    label = jax.nn.softmax(z, axis=1)
    d = jax.nn.relu(lin(z, "fc4"))
    d = jax.nn.relu(lin(d, "fc5"))
    recon = jax.nn.sigmoid(lin(d, "fc61"))
    return z, recon, label


if __name__ == "__main__":
    xn, yn = 16, 16       # inSize = 256 -> hidden 128 -> 64 -> latent 2
    B = 32                # small demo batch; auto-tb picks tb=32 (or 16 on v7x)

    key = jax.random.PRNGKey(0)
    k_params, k_x, k_eps = jax.random.split(key, 3)

    params = init_params(k_params, xn, yn)
    x = jax.random.normal(k_x, (B, xn, yn), jnp.float32)
    # eps ~ N(0,1) generated deterministically outside the kernel (replaces
    # torch.FloatTensor(...).normal_() in reparametrize).
    eps = jax.random.normal(k_eps, (B, 2), jnp.float32)

    z, recon, label = vae_forward(x, eps, params, xn=xn, yn=yn)
    jax.block_until_ready((z, recon, label))

    # sanity check against pure-JAX f32 reference
    # (tolerance relaxed for bf16 MXU inputs + bf16 recon store; error grows
    #  with in_size if xn*yn is scaled up)
    z_r, recon_r, label_r = vae_forward_ref(x, eps, params, xn, yn)
    recon_f = recon.astype(jnp.float32)
    assert jnp.allclose(z, z_r, atol=3e-2, rtol=3e-2), float(jnp.max(jnp.abs(z - z_r)))
    assert jnp.allclose(recon_f, recon_r, atol=3e-2, rtol=3e-2), float(jnp.max(jnp.abs(recon_f - recon_r)))
    assert jnp.allclose(label, label_r, atol=3e-2, rtol=3e-2), float(jnp.max(jnp.abs(label - label_r)))

    print("KERNEL_OK")
</pallas_src>

<mosaic_0001>
module attributes {stable_mosaic.version = 11 : i64} {
  func.func @_vae_kernel(%arg0: i32, %arg1: memref<32x256xf32, #tpu.memory_space<vmem>>, %arg2: memref<32x2xf32, #tpu.memory_space<vmem>>, %arg3: memref<256x128xbf16, #tpu.memory_space<vmem>>, %arg4: memref<1x128xf32, #tpu.memory_space<vmem>>, %arg5: memref<128x64xbf16, #tpu.memory_space<vmem>>, %arg6: memref<1x64xf32, #tpu.memory_space<vmem>>, %arg7: memref<64x4xbf16, #tpu.memory_space<vmem>>, %arg8: memref<1x4xf32, #tpu.memory_space<vmem>>, %arg9: memref<2x64xf32, #tpu.memory_space<vmem>>, %arg10: memref<1x64xf32, #tpu.memory_space<vmem>>, %arg11: memref<64x128xbf16, #tpu.memory_space<vmem>>, %arg12: memref<1x128xf32, #tpu.memory_space<vmem>>, %arg13: memref<128x256xbf16, #tpu.memory_space<vmem>>, %arg14: memref<1x256xf32, #tpu.memory_space<vmem>>, %arg15: memref<32x4xf32, #tpu.memory_space<vmem>>, %arg16: memref<32x256xbf16, #tpu.memory_space<vmem>>) attributes {dimension_semantics = [#tpu.dimension_semantics<parallel>], iteration_bounds = array<i64: 1>, scalar_prefetch = 0 : i64, scratch_operands = 0 : i64, tpu.core_type = #tpu.core_type<tc>, window_params = [{transform_indices = @transform_0, window_bounds = array<i64: 32, 256>}, {transform_indices = @transform_1, window_bounds = array<i64: 32, 2>}, {pipeline_mode = #tpu.pipeline_mode<synchronous>, transform_indices = @transform_2, window_bounds = array<i64: 256, 128>}, {pipeline_mode = #tpu.pipeline_mode<synchronous>, transform_indices = @transform_3, window_bounds = array<i64: 1, 128>}, {pipeline_mode = #tpu.pipeline_mode<synchronous>, transform_indices = @transform_4, window_bounds = array<i64: 128, 64>}, {pipeline_mode = #tpu.pipeline_mode<synchronous>, transform_indices = @transform_5, window_bounds = array<i64: 1, 64>}, {pipeline_mode = #tpu.pipeline_mode<synchronous>, transform_indices = @transform_6, window_bounds = array<i64: 64, 4>}, {pipeline_mode = #tpu.pipeline_mode<synchronous>, transform_indices = @transform_7, window_bounds = array<i64: 1, 4>}, {pipeline_mode = #tpu.pipeline_mode<synchronous>, transform_indices = @transform_8, window_bounds = array<i64: 2, 64>}, {pipeline_mode = #tpu.pipeline_mode<synchronous>, transform_indices = @transform_9, window_bounds = array<i64: 1, 64>}, {pipeline_mode = #tpu.pipeline_mode<synchronous>, transform_indices = @transform_10, window_bounds = array<i64: 64, 128>}, {pipeline_mode = #tpu.pipeline_mode<synchronous>, transform_indices = @transform_11, window_bounds = array<i64: 1, 128>}, {pipeline_mode = #tpu.pipeline_mode<synchronous>, transform_indices = @transform_12, window_bounds = array<i64: 128, 256>}, {pipeline_mode = #tpu.pipeline_mode<synchronous>, transform_indices = @transform_13, window_bounds = array<i64: 1, 256>}, {transform_indices = @transform_14, window_bounds = array<i64: 32, 4>}, {transform_indices = @transform_15, window_bounds = array<i64: 32, 256>}]} {
    %c0 = arith.constant 0 : index
    %c0_0 = arith.constant 0 : index
    %0 = vector.load %arg1[%c0, %c0_0] : memref<32x256xf32, #tpu.memory_space<vmem>>, vector<32x256xf32>
    %1 = arith.truncf %0 : vector<32x256xf32> to vector<32x256xbf16>
    %c0_1 = arith.constant 0 : index
    %c0_2 = arith.constant 0 : index
    %2 = vector.load %arg3[%c0_1, %c0_2] : memref<256x128xbf16, #tpu.memory_space<vmem>>, vector<256x128xbf16>
    %cst = arith.constant dense<0.000000e+00> : vector<32x128xf32>
    %3 = tpu.matmul %1, %2, %cst {dimension_numbers = #tpu.dot_dimension_numbers<[1], [0], [0], [1], [0, 0, 1, 1], [], []>} : vector<32x256xbf16>, vector<256x128xbf16>, vector<32x128xf32> -> vector<32x128xf32>
    %c0_3 = arith.constant 0 : index
    %c0_4 = arith.constant 0 : index
    %4 = vector.load %arg4[%c0_3, %c0_4] : memref<1x128xf32, #tpu.memory_space<vmem>>, vector<1x128xf32>
    %5 = vector.broadcast %4 : vector<1x128xf32> to vector<32x128xf32>
    %6 = arith.addf %3, %5 : vector<32x128xf32>
    %cst_5 = arith.constant 0.000000e+00 : f32
    %7 = vector.broadcast %cst_5 : f32 to vector<32x128xf32>
    %8 = arith.maximumf %6, %7 : vector<32x128xf32>
    %9 = arith.truncf %8 : vector<32x128xf32> to vector<32x128xbf16>
    %c0_6 = arith.constant 0 : index
    %c0_7 = arith.constant 0 : index
    %10 = vector.load %arg5[%c0_6, %c0_7] : memref<128x64xbf16, #tpu.memory_space<vmem>>, vector<128x64xbf16>
    %cst_8 = arith.constant dense<0.000000e+00> : vector<32x64xf32>
    %11 = tpu.matmul %9, %10, %cst_8 {dimension_numbers = #tpu.dot_dimension_numbers<[1], [0], [0], [1], [0, 0, 1, 1], [], []>} : vector<32x128xbf16>, vector<128x64xbf16>, vector<32x64xf32> -> vector<32x64xf32>
    %c0_9 = arith.constant 0 : index
    %c0_10 = arith.constant 0 : index
    %12 = vector.load %arg6[%c0_9, %c0_10] : memref<1x64xf32, #tpu.memory_space<vmem>>, vector<1x64xf32>
    %13 = vector.broadcast %12 : vector<1x64xf32> to vector<32x64xf32>
    %14 = arith.addf %11, %13 : vector<32x64xf32>
    %cst_11 = arith.constant 0.000000e+00 : f32
    %15 = vector.broadcast %cst_11 : f32 to vector<32x64xf32>
    %16 = arith.maximumf %14, %15 : vector<32x64xf32>
    %17 = arith.truncf %16 : vector<32x64xf32> to vector<32x64xbf16>
    %c0_12 = arith.constant 0 : index
    %c0_13 = arith.constant 0 : index
    %18 = vector.load %arg7[%c0_12, %c0_13] : memref<64x4xbf16, #tpu.memory_space<vmem>>, vector<64x4xbf16>
    %cst_14 = arith.constant dense<0.000000e+00> : vector<32x4xf32>
    %19 = tpu.matmul %17, %18, %cst_14 {dimension_numbers = #tpu.dot_dimension_numbers<[1], [0], [0], [1], [0, 0, 1, 1], [], []>} : vector<32x64xbf16>, vector<64x4xbf16>, vector<32x4xf32> -> vector<32x4xf32>
    %c0_15 = arith.constant 0 : index
    %c0_16 = arith.constant 0 : index
    %20 = vector.load %arg8[%c0_15, %c0_16] : memref<1x4xf32, #tpu.memory_space<vmem>>, vector<1x4xf32>
    %21 = vector.broadcast %20 : vector<1x4xf32> to vector<32x4xf32>
    %22 = arith.addf %19, %21 : vector<32x4xf32>
    %23 = vector.extract_strided_slice %22 {offsets = [0, 0], sizes = [32, 2], strides = [1, 1]} : vector<32x4xf32> to vector<32x2xf32>
    %24 = vector.extract_strided_slice %22 {offsets = [0, 2], sizes = [32, 2], strides = [1, 1]} : vector<32x4xf32> to vector<32x2xf32>
    %cst_17 = arith.constant 5.000000e-01 : f32
    %25 = vector.broadcast %cst_17 : f32 to vector<32x2xf32>
    %26 = arith.mulf %25, %24 : vector<32x2xf32>
    %27 = math.exp %26 : vector<32x2xf32>
    %c0_18 = arith.constant 0 : index
    %c0_19 = arith.constant 0 : index
    %28 = vector.load %arg2[%c0_18, %c0_19] : memref<32x2xf32, #tpu.memory_space<vmem>>, vector<32x2xf32>
    %29 = arith.mulf %28, %27 : vector<32x2xf32>
    %30 = arith.addf %29, %23 : vector<32x2xf32>
    %31 = vector.extract_strided_slice %30 {offsets = [0, 0], sizes = [32, 1], strides = [1, 1]} : vector<32x2xf32> to vector<32x1xf32>
    %32 = vector.extract_strided_slice %30 {offsets = [0, 1], sizes = [32, 1], strides = [1, 1]} : vector<32x2xf32> to vector<32x1xf32>
    %33 = arith.subf %31, %32 : vector<32x1xf32>
    %34 = arith.negf %33 : vector<32x1xf32>
    %35 = math.exp %34 : vector<32x1xf32>
    %cst_20 = arith.constant 1.000000e+00 : f32
    %36 = vector.broadcast %cst_20 : f32 to vector<32x1xf32>
    %37 = arith.addf %36, %35 : vector<32x1xf32>
    %38 = arith.divf %36, %37 : vector<32x1xf32>
    %c0_21 = arith.constant 0 : index
    %c0_22 = arith.constant 0 : index
    %39 = vector.load %arg15[%c0_21, %c0_22] : memref<32x4xf32, #tpu.memory_space<vmem>>, vector<32x2xf32>
    tpu.vector_store %arg15[%c0_21, %c0_22], %30 {strides = array<i32>} : memref<32x4xf32, #tpu.memory_space<vmem>>, vector<32x2xf32>,
    %c0_23 = arith.constant 0 : index
    %c2 = arith.constant 2 : index
    %40 = vector.load %arg15[%c0_23, %c2] : memref<32x4xf32, #tpu.memory_space<vmem>>, vector<32x1xf32>
    tpu.vector_store %arg15[%c0_23, %c2], %38 {strides = array<i32>} : memref<32x4xf32, #tpu.memory_space<vmem>>, vector<32x1xf32>,
    %cst_24 = arith.constant 1.000000e+00 : f32
    %41 = vector.broadcast %cst_24 : f32 to vector<32x1xf32>
    %42 = arith.subf %41, %38 : vector<32x1xf32>
    %c0_25 = arith.constant 0 : index
    %c3 = arith.constant 3 : index
    %43 = vector.load %arg15[%c0_25, %c3] : memref<32x4xf32, #tpu.memory_space<vmem>>, vector<32x1xf32>
    tpu.vector_store %arg15[%c0_25, %c3], %42 {strides = array<i32>} : memref<32x4xf32, #tpu.memory_space<vmem>>, vector<32x1xf32>,
    %44 = vector.extract_strided_slice %30 {offsets = [0, 0], sizes = [32, 1], strides = [1, 1]} : vector<32x2xf32> to vector<32x1xf32>
    %c0_26 = arith.constant 0 : index
    %c0_27 = arith.constant 0 : index
    %45 = vector.load %arg9[%c0_26, %c0_27] : memref<2x64xf32, #tpu.memory_space<vmem>>, vector<1x64xf32>
    %46 = vector.broadcast %44 : vector<32x1xf32> to vector<32x64xf32>
    %47 = vector.broadcast %45 : vector<1x64xf32> to vector<32x64xf32>
    %48 = arith.mulf %46, %47 : vector<32x64xf32>
    %49 = vector.extract_strided_slice %30 {offsets = [0, 1], sizes = [32, 1], strides = [1, 1]} : vector<32x2xf32> to vector<32x1xf32>
    %c1 = arith.constant 1 : index
    %c0_28 = arith.constant 0 : index
    %50 = vector.load %arg9[%c1, %c0_28] : memref<2x64xf32, #tpu.memory_space<vmem>>, vector<1x64xf32>
    %51 = vector.broadcast %49 : vector<32x1xf32> to vector<32x64xf32>
    %52 = vector.broadcast %50 : vector<1x64xf32> to vector<32x64xf32>
    %53 = arith.mulf %51, %52 : vector<32x64xf32>
    %54 = arith.addf %48, %53 : vector<32x64xf32>
    %c0_29 = arith.constant 0 : index
    %c0_30 = arith.constant 0 : index
    %55 = vector.load %arg10[%c0_29, %c0_30] : memref<1x64xf32, #tpu.memory_space<vmem>>, vector<1x64xf32>
    %56 = vector.broadcast %55 : vector<1x64xf32> to vector<32x64xf32>
    %57 = arith.addf %54, %56 : vector<32x64xf32>
    %cst_31 = arith.constant 0.000000e+00 : f32
    %58 = vector.broadcast %cst_31 : f32 to vector<32x64xf32>
    %59 = arith.maximumf %57, %58 : vector<32x64xf32>
    %60 = arith.truncf %59 : vector<32x64xf32> to vector<32x64xbf16>
    %c0_32 = arith.constant 0 : index
    %c0_33 = arith.constant 0 : index
    %61 = vector.load %arg11[%c0_32, %c0_33] : memref<64x128xbf16, #tpu.memory_space<vmem>>, vector<64x128xbf16>
    %cst_34 = arith.constant dense<0.000000e+00> : vector<32x128xf32>
    %62 = tpu.matmul %60, %61, %cst_34 {dimension_numbers = #tpu.dot_dimension_numbers<[1], [0], [0], [1], [0, 0, 1, 1], [], []>} : vector<32x64xbf16>, vector<64x128xbf16>, vector<32x128xf32> -> vector<32x128xf32>
    %c0_35 = arith.constant 0 : index
    %c0_36 = arith.constant 0 : index
    %63 = vector.load %arg12[%c0_35, %c0_36] : memref<1x128xf32, #tpu.memory_space<vmem>>, vector<1x128xf32>
    %64 = vector.broadcast %63 : vector<1x128xf32> to vector<32x128xf32>
    %65 = arith.addf %62, %64 : vector<32x128xf32>
    %cst_37 = arith.constant 0.000000e+00 : f32
    %66 = vector.broadcast %cst_37 : f32 to vector<32x128xf32>
    %67 = arith.maximumf %65, %66 : vector<32x128xf32>
    %68 = arith.truncf %67 : vector<32x128xf32> to vector<32x128xbf16>
    %c0_38 = arith.constant 0 : index
    %c0_39 = arith.constant 0 : index
    %69 = vector.load %arg13[%c0_38, %c0_39] : memref<128x256xbf16, #tpu.memory_space<vmem>>, vector<128x256xbf16>
    %cst_40 = arith.constant dense<0.000000e+00> : vector<32x256xf32>
    %70 = tpu.matmul %68, %69, %cst_40 {dimension_numbers = #tpu.dot_dimension_numbers<[1], [0], [0], [1], [0, 0, 1, 1], [], []>} : vector<32x128xbf16>, vector<128x256xbf16>, vector<32x256xf32> -> vector<32x256xf32>
    %c0_41 = arith.constant 0 : index
    %c0_42 = arith.constant 0 : index
    %71 = vector.load %arg14[%c0_41, %c0_42] : memref<1x256xf32, #tpu.memory_space<vmem>>, vector<1x256xf32>
    %72 = vector.broadcast %71 : vector<1x256xf32> to vector<32x256xf32>
    %73 = arith.addf %70, %72 : vector<32x256xf32>
    %74 = arith.negf %73 : vector<32x256xf32>
    %75 = math.exp %74 : vector<32x256xf32>
    %cst_43 = arith.constant 1.000000e+00 : f32
    %76 = vector.broadcast %cst_43 : f32 to vector<32x256xf32>
    %77 = arith.addf %76, %75 : vector<32x256xf32>
    %78 = arith.divf %76, %77 : vector<32x256xf32>
    %79 = arith.truncf %78 : vector<32x256xf32> to vector<32x256xbf16>
    %c0_44 = arith.constant 0 : index
    %c0_45 = arith.constant 0 : index
    %80 = vector.load %arg16[%c0_44, %c0_45] : memref<32x256xbf16, #tpu.memory_space<vmem>>, vector<32x256xbf16>
    tpu.vector_store %arg16[%c0_44, %c0_45], %79 {strides = array<i32>} : memref<32x256xbf16, #tpu.memory_space<vmem>>, vector<32x256xbf16>,
    return
  }
  func.func @transform_0(%arg0: i32) -> (i32, i32) {
    %c0_i32 = arith.constant 0 : i32
    %c0_i32_0 = arith.constant 0 : i32
    return %arg0, %c0_i32 : i32, i32
  }
  func.func @transform_1(%arg0: i32) -> (i32, i32) {
    %c0_i32 = arith.constant 0 : i32
    %c0_i32_0 = arith.constant 0 : i32
    return %arg0, %c0_i32 : i32, i32
  }
  func.func @transform_2(%arg0: i32) -> (i32, i32) {
    %c0_i32 = arith.constant 0 : i32
    %c0_i32_0 = arith.constant 0 : i32
    %c0_i32_1 = arith.constant 0 : i32
    return %c0_i32, %c0_i32_0 : i32, i32
  }
  func.func @transform_3(%arg0: i32) -> (i32, i32) {
    %c0_i32 = arith.constant 0 : i32
    %c0_i32_0 = arith.constant 0 : i32
    %c0_i32_1 = arith.constant 0 : i32
    return %c0_i32, %c0_i32_0 : i32, i32
  }
  func.func @transform_4(%arg0: i32) -> (i32, i32) {
    %c0_i32 = arith.constant 0 : i32
    %c0_i32_0 = arith.constant 0 : i32
    %c0_i32_1 = arith.constant 0 : i32
    return %c0_i32, %c0_i32_0 : i32, i32
  }
  func.func @transform_5(%arg0: i32) -> (i32, i32) {
    %c0_i32 = arith.constant 0 : i32
    %c0_i32_0 = arith.constant 0 : i32
    %c0_i32_1 = arith.constant 0 : i32
    return %c0_i32, %c0_i32_0 : i32, i32
  }
  func.func @transform_6(%arg0: i32) -> (i32, i32) {
    %c0_i32 = arith.constant 0 : i32
    %c0_i32_0 = arith.constant 0 : i32
    %c0_i32_1 = arith.constant 0 : i32
    return %c0_i32, %c0_i32_0 : i32, i32
  }
  func.func @transform_7(%arg0: i32) -> (i32, i32) {
    %c0_i32 = arith.constant 0 : i32
    %c0_i32_0 = arith.constant 0 : i32
    %c0_i32_1 = arith.constant 0 : i32
    return %c0_i32, %c0_i32_0 : i32, i32
  }
  func.func @transform_8(%arg0: i32) -> (i32, i32) {
    %c0_i32 = arith.constant 0 : i32
    %c0_i32_0 = arith.constant 0 : i32
    %c0_i32_1 = arith.constant 0 : i32
    return %c0_i32, %c0_i32_0 : i32, i32
  }
  func.func @transform_9(%arg0: i32) -> (i32, i32) {
    %c0_i32 = arith.constant 0 : i32
    %c0_i32_0 = arith.constant 0 : i32
    %c0_i32_1 = arith.constant 0 : i32
    return %c0_i32, %c0_i32_0 : i32, i32
  }
  func.func @transform_10(%arg0: i32) -> (i32, i32) {
    %c0_i32 = arith.constant 0 : i32
    %c0_i32_0 = arith.constant 0 : i32
    %c0_i32_1 = arith.constant 0 : i32
    return %c0_i32, %c0_i32_0 : i32, i32
  }
  func.func @transform_11(%arg0: i32) -> (i32, i32) {
    %c0_i32 = arith.constant 0 : i32
    %c0_i32_0 = arith.constant 0 : i32
    %c0_i32_1 = arith.constant 0 : i32
    return %c0_i32, %c0_i32_0 : i32, i32
  }
  func.func @transform_12(%arg0: i32) -> (i32, i32) {
    %c0_i32 = arith.constant 0 : i32
    %c0_i32_0 = arith.constant 0 : i32
    %c0_i32_1 = arith.constant 0 : i32
    return %c0_i32, %c0_i32_0 : i32, i32
  }
  func.func @transform_13(%arg0: i32) -> (i32, i32) {
    %c0_i32 = arith.constant 0 : i32
    %c0_i32_0 = arith.constant 0 : i32
    %c0_i32_1 = arith.constant 0 : i32
    return %c0_i32, %c0_i32_0 : i32, i32
  }
  func.func @transform_14(%arg0: i32) -> (i32, i32) {
    %c0_i32 = arith.constant 0 : i32
    %c0_i32_0 = arith.constant 0 : i32
    return %arg0, %c0_i32 : i32, i32
  }
  func.func @transform_15(%arg0: i32) -> (i32, i32) {
    %c0_i32 = arith.constant 0 : i32
    %c0_i32_0 = arith.constant 0 : i32
    return %arg0, %c0_i32 : i32, i32
  }
}

</mosaic_0001>

<llo_original>
// kernel: _vae_forward_impl.1
$region0: #{_vae_forward_impl.1}
  #allocation0 [shape = 'u32[]', space=smem, size = 0x4, offset = 0x4, fixed_abs, tag = 'smem constant byte address 0x4 - core index']
  #allocation1 [shape = 'u32[144,128]{1,0:T(1,128)}', space=vmem, size = 0x12000, scoped, tag = 'internal scratch']
  %s0 = inlined_call_operand.vmem [shape: f32[32,256], index: 0, kind: input, shape index: {}]
  %s1 = inlined_call_operand.vmem [shape: f32[32,2], index: 1, kind: input, shape index: {}]
  %s2 = inlined_call_operand.vmem [shape: bf16[256,128], index: 2, kind: input, shape index: {}]
  %s3 = inlined_call_operand.vmem [shape: f32[1,128], index: 3, kind: input, shape index: {}]
  %s4 = inlined_call_operand.vmem [shape: bf16[128,64], index: 4, kind: input, shape index: {}]
  %s5 = inlined_call_operand.vmem [shape: f32[1,64], index: 5, kind: input, shape index: {}]
  %s6 = inlined_call_operand.vmem [shape: bf16[64,4], index: 6, kind: input, shape index: {}]
  %s7 = inlined_call_operand.vmem [shape: f32[1,4], index: 7, kind: input, shape index: {}]
  %s8 = inlined_call_operand.vmem [shape: f32[2,64], index: 8, kind: input, shape index: {}]
  %s9 = inlined_call_operand.vmem [shape: f32[1,64], index: 9, kind: input, shape index: {}]
  %s10 = inlined_call_operand.vmem [shape: bf16[64,128], index: 10, kind: input, shape index: {}]
  %s11 = inlined_call_operand.vmem [shape: f32[1,128], index: 11, kind: input, shape index: {}]
  %s12 = inlined_call_operand.vmem [shape: bf16[128,256], index: 12, kind: input, shape index: {}]
  %s13 = inlined_call_operand.vmem [shape: f32[1,256], index: 13, kind: input, shape index: {}]
  %s14 = inlined_call_operand.vmem [shape: f32[32,4], index: 14, kind: output, shape index: {0}]
  %s15 = inlined_call_operand.hbm [shape: bf16[32,256], index: 15, kind: output, shape index: {1}]
  %16 = xla_tuple %s14, %s15
  %s17 = sld [smem:[#allocation0]]
  $region74: #{_vae_forward_impl.1} parent=0
    _
  %s19 = ssub.s32 1, %s17
  %s20 = scalar_select 0, %s19, %s17
  $region1: #{_vae_forward_impl.1} parent=0
    #allocation2 [shape = 'u8[16384]{0}', space=vmem, size = 0x4000, scoped, tag = 'output window, operand 1, single buffered']
    #allocation3 [shape = 's32[1]{0}', space=sflag, size = 0x4, scoped, tag = 'scoped memory for _vae_forward_impl.1']
    %21 = vsyncpa [#allocation3], 0
    // Predicated region
    $region2: #{_vae_forward_impl.1} parent=1 // pred_check
      _
    $region3: #{_vae_forward_impl.1} parent=1 // pred_check_branch
      %23 = sbr.rel (0) target = $region5
    $region4: #{_vae_forward_impl.1} parent=1 // pred_region
      _
    $region5: #{_vae_forward_impl.1} parent=1 // pred_fallthru
      _
    // Predicated region
    $region6: #{_vae_forward_impl.1} parent=1 // pred_check
      _
    $region7: #{_vae_forward_impl.1} parent=1 // pred_check_branch
      %25 = sbr.rel (0) target = $region9
    $region8: #{_vae_forward_impl.1} parent=1 // pred_region
      _
    $region9: #{_vae_forward_impl.1} parent=1 // pred_fallthru
      _
    // Predicated region
    $region10: #{_vae_forward_impl.1} parent=1 // pred_check
      _
    $region11: #{_vae_forward_impl.1} parent=1 // pred_check_branch
      %27 = sbr.rel (0) target = $region13
    $region12: #{_vae_forward_impl.1} parent=1 // pred_region
      _
    $region13: #{_vae_forward_impl.1} parent=1 // pred_fallthru
      _
    // Predicated region
    $region14: #{_vae_forward_impl.1} parent=1 // pred_check
      _
    $region15: #{_vae_forward_impl.1} parent=1 // pred_check_branch
      %29 = sbr.rel (0) target = $region17
    $region16: #{_vae_forward_impl.1} parent=1 // pred_region
      _
    $region17: #{_vae_forward_impl.1} parent=1 // pred_fallthru
      _
    // Predicated region
    $region18: #{_vae_forward_impl.1} parent=1 // pred_check
      _
    $region19: #{_vae_forward_impl.1} parent=1 // pred_check_branch
      %31 = sbr.rel (0) target = $region21
    $region20: #{_vae_forward_impl.1} parent=1 // pred_region
      _
    $region21: #{_vae_forward_impl.1} parent=1 // pred_fallthru
      _
    // Predicated region
    $region22: #{_vae_forward_impl.1} parent=1 // pred_check
      _
    $region23: #{_vae_forward_impl.1} parent=1 // pred_check_branch
      %33 = sbr.rel (0) target = $region25
    $region24: #{_vae_forward_impl.1} parent=1 // pred_region
      _
    $region25: #{_vae_forward_impl.1} parent=1 // pred_fallthru
      _
    // Predicated region
    $region26: #{_vae_forward_impl.1} parent=1 // pred_check
      _
    $region27: #{_vae_forward_impl.1} parent=1 // pred_check_branch
      %35 = sbr.rel (0) target = $region29
    $region28: #{_vae_forward_impl.1} parent=1 // pred_region
      _
    $region29: #{_vae_forward_impl.1} parent=1 // pred_fallthru
      _
    // Predicated region
    $region30: #{_vae_forward_impl.1} parent=1 // pred_check
      _
    $region31: #{_vae_forward_impl.1} parent=1 // pred_check_branch
      %37 = sbr.rel (0) target = $region33
    $region32: #{_vae_forward_impl.1} parent=1 // pred_region
      _
    $region33: #{_vae_forward_impl.1} parent=1 // pred_fallthru
      _
    // Predicated region
    $region34: #{_vae_forward_impl.1} parent=1 // pred_check
      _
    $region35: #{_vae_forward_impl.1} parent=1 // pred_check_branch
      %39 = sbr.rel (0) target = $region37
    $region36: #{_vae_forward_impl.1} parent=1 // pred_region
      _
    $region37: #{_vae_forward_impl.1} parent=1 // pred_fallthru
      _
    // Predicated region
    $region38: #{_vae_forward_impl.1} parent=1 // pred_check
      _
    $region39: #{_vae_forward_impl.1} parent=1 // pred_check_branch
      %41 = sbr.rel (0) target = $region41
    $region40: #{_vae_forward_impl.1} parent=1 // pred_region
      _
    $region41: #{_vae_forward_impl.1} parent=1 // pred_fallthru
      _
    // Predicated region
    $region42: #{_vae_forward_impl.1} parent=1 // pred_check
      _
    $region43: #{_vae_forward_impl.1} parent=1 // pred_check_branch
      %43 = sbr.rel (0) target = $region45
    $region44: #{_vae_forward_impl.1} parent=1 // pred_region
      _
    $region45: #{_vae_forward_impl.1} parent=1 // pred_fallthru
      _
    // Predicated region
    $region46: #{_vae_forward_impl.1} parent=1 // pred_check
      _
    $region47: #{_vae_forward_impl.1} parent=1 // pred_check_branch
      %45 = sbr.rel (0) target = $region49
    $region48: #{_vae_forward_impl.1} parent=1 // pred_region
      _
    $region49: #{_vae_forward_impl.1} parent=1 // pred_fallthru
      _
    // Predicated region
    $region50: #{_vae_forward_impl.1} parent=1 // pred_check
      _
    $region51: #{_vae_forward_impl.1} parent=1 // pred_check_branch
      %47 = sbr.rel (0) target = $region53
    $region52: #{_vae_forward_impl.1} parent=1 // pred_region
      _
    $region53: #{_vae_forward_impl.1} parent=1 // pred_fallthru
      _
    // Predicated region
    $region54: #{_vae_forward_impl.1} parent=1 // pred_check
      _
    $region55: #{_vae_forward_impl.1} parent=1 // pred_check_branch
      %49 = sbr.rel (0) target = $region57
    $region56: #{_vae_forward_impl.1} parent=1 // pred_region
      _
    $region57: #{_vae_forward_impl.1} parent=1 // pred_fallthru
      _
    %v51 = vld [vmem:[%s0] sm:$0xff]
    %v52 = vld [vmem:[%s0 + $0x8] sm:$0xff]
    %v53 = vld [vmem:[%s0 + $0x10] sm:$0xff]
    %v54 = vld [vmem:[%s0 + $0x18] sm:$0xff]
    %v55 = vld [vmem:[%s0 + $0x20] sm:$0xff]
    %v56 = vld [vmem:[%s0 + $0x28] sm:$0xff]
    %v57 = vld [vmem:[%s0 + $0x30] sm:$0xff]
    %v58 = vld [vmem:[%s0 + $0x38] sm:$0xff]
    %v59 = vpack.c.bf16 %v53, %v51
    %v60 = vpack.c.bf16 %v54, %v52
    %v61 = vpack.c.bf16 %v57, %v55
    %v62 = vpack.c.bf16 %v58, %v56
    %v63 = vld [vmem:[%s2] sm:$0xf]
    %v64 = vld [vmem:[%s2 + $0x4] sm:$0xf]
    %v65 = vld [vmem:[%s2 + $0x8] sm:$0xf]
    %v66 = vld [vmem:[%s2 + $0xc] sm:$0xf]
    %v67 = vld [vmem:[%s2 + $0x10] sm:$0xf]
    %v68 = vld [vmem:[%s2 + $0x14] sm:$0xf]
    %v69 = vld [vmem:[%s2 + $0x18] sm:$0xf]
    %v70 = vld [vmem:[%s2 + $0x1c] sm:$0xf]
    %v71 = vld [vmem:[%s2 + $0x20] sm:$0xf]
    %v72 = vld [vmem:[%s2 + $0x24] sm:$0xf]
    %v73 = vld [vmem:[%s2 + $0x28] sm:$0xf]
    %v74 = vld [vmem:[%s2 + $0x2c] sm:$0xf]
    %v75 = vld [vmem:[%s2 + $0x30] sm:$0xf]
    %v76 = vld [vmem:[%s2 + $0x34] sm:$0xf]
    %v77 = vld [vmem:[%s2 + $0x38] sm:$0xf]
    %v78 = vld [vmem:[%s2 + $0x3c] sm:$0xf]
    %v79 = vld [vmem:[%s2 + $0x40] sm:$0xf]
    %v80 = vld [vmem:[%s2 + $0x44] sm:$0xf]
    %v81 = vld [vmem:[%s2 + $0x48] sm:$0xf]
    %v82 = vld [vmem:[%s2 + $0x4c] sm:$0xf]
    %v83 = vld [vmem:[%s2 + $0x50] sm:$0xf]
    %v84 = vld [vmem:[%s2 + $0x54] sm:$0xf]
    %v85 = vld [vmem:[%s2 + $0x58] sm:$0xf]
    %v86 = vld [vmem:[%s2 + $0x5c] sm:$0xf]
    %v87 = vld [vmem:[%s2 + $0x60] sm:$0xf]
    %v88 = vld [vmem:[%s2 + $0x64] sm:$0xf]
    %v89 = vld [vmem:[%s2 + $0x68] sm:$0xf]
    %v90 = vld [vmem:[%s2 + $0x6c] sm:$0xf]
    %v91 = vld [vmem:[%s2 + $0x70] sm:$0xf]
    %v92 = vld [vmem:[%s2 + $0x74] sm:$0xf]
    %v93 = vld [vmem:[%s2 + $0x78] sm:$0xf]
    %v94 = vld [vmem:[%s2 + $0x7c] sm:$0xf]
    %v95 = vld [vmem:[%s3] sm:$0x1]
    %v97 = vlaneseq
    %v98 = vshrl.u32 %v97, 7
    %v99 = vsub.s32 0, %v98
    %v100 = vrot.slane %v95, %v99
    %v134 = vunpack.c.l.b16 %v63
    %v135 = vunpack.c.l.b16 %v64
    %v136 = vunpack.c.l.b16 %v65
    %v137 = vunpack.c.l.b16 %v66
    %v138 = vunpack.c.l.b16 %v67
    %v139 = vunpack.c.l.b16 %v68
    %v140 = vunpack.c.l.b16 %v69
    %v141 = vunpack.c.l.b16 %v70
    %v142 = vunpack.c.l.b16 %v71
    %v143 = vunpack.c.l.b16 %v72
    %v144 = vunpack.c.l.b16 %v73
    %v145 = vunpack.c.l.b16 %v74
    %v146 = vunpack.c.l.b16 %v75
    %v147 = vunpack.c.l.b16 %v76
    %v148 = vunpack.c.l.b16 %v77
    %v149 = vunpack.c.l.b16 %v78
    %v150 = vunpack.c.l.b16 %v79
    %v151 = vunpack.c.l.b16 %v80
    %v152 = vunpack.c.l.b16 %v81
    %v153 = vunpack.c.l.b16 %v82
    %v154 = vunpack.c.l.b16 %v83
    %v155 = vunpack.c.l.b16 %v84
    %v156 = vunpack.c.l.b16 %v85
    %v157 = vunpack.c.l.b16 %v86
    %v158 = vunpack.c.l.b16 %v87
    %v159 = vunpack.c.l.b16 %v88
    %v160 = vunpack.c.l.b16 %v89
    %v161 = vunpack.c.l.b16 %v90
    %v162 = vunpack.c.l.b16 %v91
    %v163 = vunpack.c.l.b16 %v92
    %v164 = vunpack.c.l.b16 %v93
    %v165 = vunpack.c.l.b16 %v94
    %v166 = vpack.c.b16 %v135, %v134
    %v167 = vpack.c.b16 %v137, %v136
    %v168 = vpack.c.b16 %v139, %v138
    %v169 = vpack.c.b16 %v141, %v140
    %v170 = vpack.c.b16 %v143, %v142
    %v171 = vpack.c.b16 %v145, %v144
    %v172 = vpack.c.b16 %v147, %v146
    %v173 = vpack.c.b16 %v149, %v148
    %v174 = vpack.c.b16 %v151, %v150
    %v175 = vpack.c.b16 %v153, %v152
    %v176 = vpack.c.b16 %v155, %v154
    %v177 = vpack.c.b16 %v157, %v156
    %v178 = vpack.c.b16 %v159, %v158
    %v179 = vpack.c.b16 %v161, %v160
    %v180 = vpack.c.b16 %v163, %v162
    %v181 = vpack.c.b16 %v165, %v164
    %198 = vmatprep.subr.bf16.mxu0 0
    %199 = vmatpush1.bf16.msra.mxu0 %v173
    %200 = vmatprep.subr.bf16.mxu0 0
    %201 = vmatpush1.bf16.msra.mxu0 %v172
    %202 = vmatprep.subr.bf16.mxu0 0
    %203 = vmatpush1.bf16.msra.mxu0 %v171
    %204 = vmatprep.subr.bf16.mxu0 0
    %205 = vmatpush1.bf16.msra.mxu0 %v170
    %206 = vmatprep.subr.bf16.mxu0 0
    %207 = vmatpush1.bf16.msra.mxu0 %v169
    %208 = vmatprep.subr.bf16.mxu0 0
    %209 = vmatpush1.bf16.msra.mxu0 %v168
    %210 = vmatprep.subr.bf16.mxu0 0
    %211 = vmatpush1.bf16.msra.mxu0 %v167
    %212 = vmatprep.subr.bf16.mxu0 0
    %213 = vmatpush1.bf16.msra.mxu0 %v166
    %214 = vmatprep.subr.bf16.mxu0 0
    %215 = vmatpush2.bf16.msra.mxu0 %v181
    %216 = vmatprep.subr.bf16.mxu0 0
    %217 = vmatpush2.bf16.msra.mxu0 %v180
    %218 = vmatprep.subr.bf16.mxu0 0
    %219 = vmatpush2.bf16.msra.mxu0 %v179
    %220 = vmatprep.subr.bf16.mxu0 0
    %221 = vmatpush2.bf16.msra.mxu0 %v178
    %222 = vmatprep.subr.bf16.mxu0 0
    %223 = vmatpush2.bf16.msra.mxu0 %v177
    %224 = vmatprep.subr.bf16.mxu0 0
    %225 = vmatpush2.bf16.msra.mxu0 %v176
    %226 = vmatprep.subr.bf16.mxu0 0
    %227 = vmatpush2.bf16.msra.mxu0 %v175
    %228 = vmatprep.subr.bf16.mxu0 0
    %229 = vmatpush2.bf16.msra.mxu0 %v174
    %230 = vmatprep.mubr.bf16.mxu0 %v60
    %231 = vmatmul.mubr.bf16.gmra.mxu0 %v59
    %v232 = vpop.f32.mrf.mxu0
    %v233 = vadd.f32 %v100, %v232
    %v234 = vpop.f32.mrf.mxu0
    %v235 = vpop.f32.mrf.mxu0
    %v236 = vadd.f32 %v100, %v235
    %v237 = vpop.f32.mrf.mxu0
    %238 = vmatprep.mubr.bf16.mxu0 %v62
    %239 = vmatmul.mubr.bf16.gmra.mxu0 %v61
    %v240 = vpop.f32.mrf.mxu0
    %v241 = vadd.f32 %v100, %v240
    %v242 = vpop.f32.mrf.mxu0
    %v243 = vpop.f32.mrf.mxu0
    %v244 = vadd.f32 %v100, %v243
    %v245 = vpop.f32.mrf.mxu0
    %246 = vdwg.mxu0
    %v247 = vmax.f32 %v233, 0.0
    %v248 = vmax.f32 %v236, 0.0
    %v249 = vmax.f32 %v241, 0.0
    %v250 = vmax.f32 %v244, 0.0
    %v251 = vpack.c.bf16 %v248, %v247
    %v252 = vpack.c.bf16 %v250, %v249
    %v253 = vld [vmem:[%s4] sm:$0xf]
    %v254 = vld [vmem:[%s4 + $0x4] sm:$0xf]
    %v255 = vld [vmem:[%s4 + $0x8] sm:$0xf]
    %v256 = vld [vmem:[%s4 + $0xc] sm:$0xf]
    %v257 = vld [vmem:[%s4 + $0x10] sm:$0xf]
    %v258 = vld [vmem:[%s4 + $0x14] sm:$0xf]
    %v259 = vld [vmem:[%s4 + $0x18] sm:$0xf]
    %v260 = vld [vmem:[%s4 + $0x1c] sm:$0xf]
    %v261 = vld [vmem:[%s4 + $0x20] sm:$0xf]
    %v262 = vld [vmem:[%s4 + $0x24] sm:$0xf]
    %v263 = vld [vmem:[%s4 + $0x28] sm:$0xf]
    %v264 = vld [vmem:[%s4 + $0x2c] sm:$0xf]
    %v265 = vld [vmem:[%s4 + $0x30] sm:$0xf]
    %v266 = vld [vmem:[%s4 + $0x34] sm:$0xf]
    %v267 = vld [vmem:[%s4 + $0x38] sm:$0xf]
    %v268 = vld [vmem:[%s4 + $0x3c] sm:$0xf]
    %v269 = vld [vmem:[%s5] sm:$0x1]
    %v271 = vlaneseq
    %v272 = vshrl.u32 %v271, 7
    %v273 = vsub.s32 0, %v272
    %v274 = vrot.slane %v269, %v273
    %v292 = vunpack.c.l.b16 %v253
    %v293 = vunpack.c.l.b16 %v254
    %v294 = vunpack.c.l.b16 %v255
    %v295 = vunpack.c.l.b16 %v256
    %v296 = vunpack.c.l.b16 %v257
    %v297 = vunpack.c.l.b16 %v258
    %v298 = vunpack.c.l.b16 %v259
    %v299 = vunpack.c.l.b16 %v260
    %v300 = vunpack.c.l.b16 %v261
    %v301 = vunpack.c.l.b16 %v262
    %v302 = vunpack.c.l.b16 %v263
    %v303 = vunpack.c.l.b16 %v264
    %v304 = vunpack.c.l.b16 %v265
    %v305 = vunpack.c.l.b16 %v266
    %v306 = vunpack.c.l.b16 %v267
    %v307 = vunpack.c.l.b16 %v268
    %v308 = vpack.c.b16 %v293, %v292
    %v309 = vpack.c.b16 %v295, %v294
    %v310 = vpack.c.b16 %v297, %v296
    %v311 = vpack.c.b16 %v299, %v298
    %v312 = vpack.c.b16 %v301, %v300
    %v313 = vpack.c.b16 %v303, %v302
    %v314 = vpack.c.b16 %v305, %v304
    %v315 = vpack.c.b16 %v307, %v306
    %324 = vmatprep.subr.bf16.mxu0 0
    %325 = vmatpush1.bf16.msra.mxu0 %v315
    %326 = vmatprep.subr.bf16.mxu0 0
    %327 = vmatpush1.bf16.msra.mxu0 %v314
    %328 = vmatprep.subr.bf16.mxu0 0
    %329 = vmatpush1.bf16.msra.mxu0 %v313
    %330 = vmatprep.subr.bf16.mxu0 0
    %331 = vmatpush1.bf16.msra.mxu0 %v312
    %332 = vmatprep.subr.bf16.mxu0 0
    %333 = vmatpush1.bf16.msra.mxu0 %v311
    %334 = vmatprep.subr.bf16.mxu0 0
    %335 = vmatpush1.bf16.msra.mxu0 %v310
    %336 = vmatprep.subr.bf16.mxu0 0
    %337 = vmatpush1.bf16.msra.mxu0 %v309
    %338 = vmatprep.subr.bf16.mxu0 0
    %339 = vmatpush1.bf16.msra.mxu0 %v308
    %340 = vmatprep.subr.bf16.mxu0 0
    %341 = vmatpush2.bf16.msra.mxu0 0
    %342 = vmatprep.subr.bf16.mxu0 0
    %343 = vmatpush2.bf16.msra.mxu0 0
    %344 = vmatprep.subr.bf16.mxu0 0
    %345 = vmatpush2.bf16.msra.mxu0 0
    %346 = vmatprep.subr.bf16.mxu0 0
    %347 = vmatpush2.bf16.msra.mxu0 0
    %348 = vmatprep.subr.bf16.mxu0 0
    %349 = vmatpush2.bf16.msra.mxu0 0
    %350 = vmatprep.subr.bf16.mxu0 0
    %351 = vmatpush2.bf16.msra.mxu0 0
    %352 = vmatprep.subr.bf16.mxu0 0
    %353 = vmatpush2.bf16.msra.mxu0 0
    %354 = vmatprep.subr.bf16.mxu0 0
    %355 = vmatpush2.bf16.msra.mxu0 0
    %356 = vmatprep.mubr.bf16.mxu0 0
    %357 = vmatmul.mubr.bf16.gmra.mxu0 %v251
    %v358 = vpop.f32.mrf.mxu0
    %v359 = vadd.f32 %v274, %v358
    %v360 = vpop.f32.mrf.mxu0
    %v361 = vpop.f32.mrf.mxu0
    %v362 = vadd.f32 %v274, %v361
    %v363 = vpop.f32.mrf.mxu0
    %364 = vmatprep.mubr.bf16.mxu0 0
    %365 = vmatmul.mubr.bf16.gmra.mxu0 %v252
    %v366 = vpop.f32.mrf.mxu0
    %v367 = vadd.f32 %v274, %v366
    %v368 = vpop.f32.mrf.mxu0
    %v369 = vpop.f32.mrf.mxu0
    %v370 = vadd.f32 %v274, %v369
    %v371 = vpop.f32.mrf.mxu0
    %372 = vdwg.mxu0
    %v373 = vmax.f32 %v359, 0.0
    %v374 = vmax.f32 %v362, 0.0
    %v375 = vmax.f32 %v367, 0.0
    %v376 = vmax.f32 %v370, 0.0
    %v377 = vpack.c.bf16 %v374, %v373
    %v378 = vpack.c.bf16 %v376, %v375
    %v379 = vld [vmem:[%s6] sm:$0xf]
    %v380 = vld [vmem:[%s6 + $0x4] sm:$0xf]
    %v381 = vld [vmem:[%s6 + $0x8] sm:$0xf]
    %v382 = vld [vmem:[%s6 + $0xc] sm:$0xf]
    %v383 = vld [vmem:[%s6 + $0x10] sm:$0xf]
    %v384 = vld [vmem:[%s6 + $0x14] sm:$0xf]
    %v385 = vld [vmem:[%s6 + $0x18] sm:$0xf]
    %v386 = vld [vmem:[%s6 + $0x1c] sm:$0xf]
    %v387 = vld [vmem:[%s7] sm:$0x1]
    %v389 = vlaneseq
    %v390 = vshrl.u32 %v389, 7
    %v391 = vsub.s32 0, %v390
    %v392 = vrot.slane %v387, %v391
    %v402 = vunpack.c.l.b16 %v379
    %v403 = vunpack.c.l.b16 %v380
    %v404 = vunpack.c.l.b16 %v381
    %v405 = vunpack.c.l.b16 %v382
    %v406 = vunpack.c.l.b16 %v383
    %v407 = vunpack.c.l.b16 %v384
    %v408 = vunpack.c.l.b16 %v385
    %v409 = vunpack.c.l.b16 %v386
    %v410 = vpack.c.b16 %v403, %v402
    %v411 = vpack.c.b16 %v405, %v404
    %v412 = vpack.c.b16 %v407, %v406
    %v413 = vpack.c.b16 %v409, %v408
    %vm418 = vcmask 523264
    %v420 = vsel %vm418, %v377, 0
    %v423 = vsel %vm418, %v378, 0
    %425 = vmatprep.subr.bf16.mxu0 0
    %426 = vmatpush1.bf16.msra.mxu0 0
    %427 = vmatprep.subr.bf16.mxu0 0
    %428 = vmatpush1.bf16.msra.mxu0 0
    %429 = vmatprep.subr.bf16.mxu0 0
    %430 = vmatpush1.bf16.msra.mxu0 0
    %431 = vmatprep.subr.bf16.mxu0 0
    %432 = vmatpush1.bf16.msra.mxu0 0
    %433 = vmatprep.subr.bf16.mxu0 0
    %434 = vmatpush1.bf16.msra.mxu0 %v413
    %435 = vmatprep.subr.bf16.mxu0 0
    %436 = vmatpush1.bf16.msra.mxu0 %v412
    %437 = vmatprep.subr.bf16.mxu0 0
    %438 = vmatpush1.bf16.msra.mxu0 %v411
    %439 = vmatprep.subr.bf16.mxu0 0
    %440 = vmatpush1.bf16.msra.mxu0 %v410
    %441 = vmatprep.subr.bf16.mxu0 0
    %442 = vmatpush2.bf16.msra.mxu0 0
    %443 = vmatprep.subr.bf16.mxu0 0
    %444 = vmatpush2.bf16.msra.mxu0 0
    %445 = vmatprep.subr.bf16.mxu0 0
    %446 = vmatpush2.bf16.msra.mxu0 0
    %447 = vmatprep.subr.bf16.mxu0 0
    %448 = vmatpush2.bf16.msra.mxu0 0
    %449 = vmatprep.subr.bf16.mxu0 0
    %450 = vmatpush2.bf16.msra.mxu0 0
    %451 = vmatprep.subr.bf16.mxu0 0
    %452 = vmatpush2.bf16.msra.mxu0 0
    %453 = vmatprep.subr.bf16.mxu0 0
    %454 = vmatpush2.bf16.msra.mxu0 0
    %455 = vmatprep.subr.bf16.mxu0 0
    %456 = vmatpush2.bf16.msra.mxu0 0
    %457 = vmatprep.mubr.bf16.mxu0 0
    %458 = vmatmul.mubr.bf16.gmra.mxu0 %v420
    %v459 = vpop.f32.mrf.mxu0
    %v460 = vadd.f32 %v392, %v459
    %v461 = vpop.f32.mrf.mxu0
    %v462 = vpop.f32.mrf.mxu0
    %v463 = vadd.f32 %v392, %v462
    %v464 = vpop.f32.mrf.mxu0
    %465 = vmatprep.mubr.bf16.mxu0 0
    %466 = vmatmul.mubr.bf16.gmra.mxu0 %v423
    %v467 = vpop.f32.mrf.mxu0
    %v468 = vadd.f32 %v392, %v467
    %v469 = vpop.f32.mrf.mxu0
    %v470 = vpop.f32.mrf.mxu0
    %v471 = vadd.f32 %v392, %v470
    %v472 = vpop.f32.mrf.mxu0
    %473 = vdwg.mxu0
    %v474 = vmul.f32 %v460, 0.5
    %v475 = vmul.f32 %v463, 0.5
    %v476 = vmul.f32 %v468, 0.5
    %v477 = vmul.f32 %v471, 0.5
    %v478 = vmul.f32 %v474, 1.442695
    %v479 = vpow.pop %v478
    %v480 = vmul.f32 %v475, 1.442695
    %v481 = vpow.pop %v480
    %v482 = vmul.f32 %v476, 1.442695
    %v483 = vpow.pop %v482
    %v484 = vmul.f32 %v477, 1.442695
    %v485 = vpow.pop %v484
    %v486 = vld [vmem:[%s1] sm:$0xff]
    %v487 = vld [vmem:[%s1 + $0x8] sm:$0xff]
    %v488 = vld [vmem:[%s1 + $0x10] sm:$0xff]
    %v489 = vld [vmem:[%s1 + $0x18] sm:$0xff]
    %494 = vrot.lane.b32.xlu0 %v479, 126
    %v495 = vpop.permute.xlu0 %494
    %496 = vrot.lane.b32.xlu0 %v481, 126
    %v497 = vpop.permute.xlu0 %496
    %498 = vrot.lane.b32.xlu0 %v483, 126
    %v499 = vpop.permute.xlu0 %498
    %500 = vrot.lane.b32.xlu0 %v485, 126
    %v501 = vpop.permute.xlu0 %500
    %v506 = vmul.f32 %v486, %v495
    %v507 = vmul.f32 %v487, %v497
    %v508 = vmul.f32 %v488, %v499
    %v509 = vmul.f32 %v489, %v501
    %v510 = vadd.f32 %v506, %v460
    %v511 = vadd.f32 %v507, %v463
    %v512 = vadd.f32 %v508, %v468
    %v513 = vadd.f32 %v509, %v471
    %518 = vrot.lane.b32.xlu0 %v510, 127
    %v519 = vpop.permute.xlu0 %518
    %520 = vrot.lane.b32.xlu0 %v511, 127
    %v521 = vpop.permute.xlu0 %520
    %522 = vrot.lane.b32.xlu0 %v512, 127
    %v523 = vpop.permute.xlu0 %522
    %524 = vrot.lane.b32.xlu0 %v513, 127
    %v525 = vpop.permute.xlu0 %524
    %v530 = vsub.f32 %v510, %v519
    %v531 = vsub.f32 %v511, %v521
    %v532 = vsub.f32 %v512, %v523
    %v533 = vsub.f32 %v513, %v525
    %v534 = vxor.u32 %v530, 2147483648
    %v535 = vxor.u32 %v531, 2147483648
    %v536 = vxor.u32 %v532, 2147483648
    %v537 = vxor.u32 %v533, 2147483648
    %v538 = vmul.f32 %v534, 1.442695
    %v539 = vpow.pop %v538
    %v540 = vmul.f32 %v535, 1.442695
    %v541 = vpow.pop %v540
    %v542 = vmul.f32 %v536, 1.442695
    %v543 = vpow.pop %v542
    %v544 = vmul.f32 %v537, 1.442695
    %v545 = vpow.pop %v544
    %v546 = vadd.f32 %v539, 1.0
    %v547 = vadd.f32 %v541, 1.0
    %v548 = vadd.f32 %v543, 1.0
    %v549 = vadd.f32 %v545, 1.0
    %v550 = vrcp.pop %v546
    %v551 = vmul.f32 1.0, %v550
    %v552 = vrcp.pop %v547
    %v553 = vmul.f32 1.0, %v552
    %v554 = vrcp.pop %v548
    %v555 = vmul.f32 1.0, %v554
    %v556 = vrcp.pop %v549
    %v557 = vmul.f32 1.0, %v556
    %vm558 = vcmask 15360
    %559 = vst.msk [vmem:[%s14] sm:$0xff] %vm558, %v510
    %560 = vst.msk [vmem:[%s14 + $0x8] sm:$0xff] %vm558, %v511
    %561 = vst.msk [vmem:[%s14 + $0x10] sm:$0xff] %vm558, %v512
    %562 = vst.msk [vmem:[%s14 + $0x18] sm:$0xff] %vm558, %v513
    %567 = vrot.lane.b32.xlu0 %v551, 2
    %v568 = vpop.permute.xlu0 %567
    %569 = vrot.lane.b32.xlu0 %v553, 2
    %v570 = vpop.permute.xlu0 %569
    %571 = vrot.lane.b32.xlu0 %v555, 2
    %v572 = vpop.permute.xlu0 %571
    %573 = vrot.lane.b32.xlu0 %v557, 2
    %v574 = vpop.permute.xlu0 %573
    %vm579 = vcmask 23568
    %580 = vst.msk [vmem:[%s14] sm:$0xff] %vm579, %v568
    %581 = vst.msk [vmem:[%s14 + $0x8] sm:$0xff] %vm579, %v570
    %582 = vst.msk [vmem:[%s14 + $0x10] sm:$0xff] %vm579, %v572
    %583 = vst.msk [vmem:[%s14 + $0x18] sm:$0xff] %vm579, %v574
    %v584 = vsub.f32 1.0, %v551
    %v585 = vsub.f32 1.0, %v553
    %v586 = vsub.f32 1.0, %v555
    %v587 = vsub.f32 1.0, %v557
    %592 = vrot.lane.b32.xlu0 %v584, 3
    %v593 = vpop.permute.xlu0 %592
    %594 = vrot.lane.b32.xlu0 %v585, 3
    %v595 = vpop.permute.xlu0 %594
    %596 = vrot.lane.b32.xlu0 %v586, 3
    %v597 = vpop.permute.xlu0 %596
    %598 = vrot.lane.b32.xlu0 %v587, 3
    %v599 = vpop.permute.xlu0 %598
    %vm604 = vcmask 31768
    %605 = vst.msk [vmem:[%s14] sm:$0xff] %vm604, %v593
    %606 = vst.msk [vmem:[%s14 + $0x8] sm:$0xff] %vm604, %v595
    %607 = vst.msk [vmem:[%s14 + $0x10] sm:$0xff] %vm604, %v597
    %608 = vst.msk [vmem:[%s14 + $0x18] sm:$0xff] %vm604, %v599
    %v609 = vld [vmem:[%s8] sm:$0x1]
    %610 = vset.pattern.permute.xlu0 0
    %611 = vperm.xlu0 %610, %v510
    %v612 = vpop.permute.xlu0 %611
    %614 = vset.pattern.permute.xlu0 0
    %615 = vperm.xlu0 %614, %v511
    %v616 = vpop.permute.xlu0 %615
    %618 = vset.pattern.permute.xlu0 0
    %619 = vperm.xlu0 %618, %v512
    %v620 = vpop.permute.xlu0 %619
    %622 = vset.pattern.permute.xlu0 0
    %623 = vperm.xlu0 %622, %v513
    %v624 = vpop.permute.xlu0 %623
    %v626 = vlaneseq
    %v627 = vshrl.u32 %v626, 7
    %v628 = vsub.s32 0, %v627
    %v629 = vrot.slane %v609, %v628
    %v630 = vmul.f32 %v612, %v629
    %v631 = vmul.f32 %v616, %v629
    %v632 = vmul.f32 %v620, %v629
    %v633 = vmul.f32 %v624, %v629
    %v634 = vld [vmem:[%s8 + $0x1] sm:$0x1]
    %635 = vset.pattern.permute.xlu0 1
    %636 = vperm.xlu0 %635, %v510
    %v637 = vpop.permute.xlu0 %636
    %639 = vset.pattern.permute.xlu0 1
    %640 = vperm.xlu0 %639, %v511
    %v641 = vpop.permute.xlu0 %640
    %643 = vset.pattern.permute.xlu0 1
    %644 = vperm.xlu0 %643, %v512
    %v645 = vpop.permute.xlu0 %644
    %647 = vset.pattern.permute.xlu0 1
    %648 = vperm.xlu0 %647, %v513
    %v649 = vpop.permute.xlu0 %648
    %v651 = vlaneseq
    %v652 = vshrl.u32 %v651, 7
    %v653 = vsub.s32 0, %v652
    %v654 = vrot.slane %v634, %v653
    %v655 = vmul.f32 %v637, %v654
    %v656 = vmul.f32 %v641, %v654
    %v657 = vmul.f32 %v645, %v654
    %v658 = vmul.f32 %v649, %v654
    %v659 = vadd.f32 %v630, %v655
    %v660 = vadd.f32 %v631, %v656
    %v661 = vadd.f32 %v632, %v657
    %v662 = vadd.f32 %v633, %v658
    %v663 = vld [vmem:[%s9] sm:$0x1]
    %v665 = vlaneseq
    %v666 = vshrl.u32 %v665, 7
    %v667 = vsub.s32 0, %v666
    %v668 = vrot.slane %v663, %v667
    %v670 = vadd.f32 %v659, %v668
    %v671 = vadd.f32 %v660, %v668
    %v672 = vadd.f32 %v661, %v668
    %v673 = vadd.f32 %v662, %v668
    %v674 = vmax.f32 %v670, 0.0
    %v675 = vmax.f32 %v671, 0.0
    %v676 = vmax.f32 %v672, 0.0
    %v677 = vmax.f32 %v673, 0.0
    %v678 = vpack.c.bf16 %v675, %v674
    %v679 = vpack.c.bf16 %v677, %v676
    %v680 = vld [vmem:[%s10] sm:$0xf]
    %v681 = vld [vmem:[%s10 + $0x4] sm:$0xf]
    %v682 = vld [vmem:[%s10 + $0x8] sm:$0xf]
    %v683 = vld [vmem:[%s10 + $0xc] sm:$0xf]
    %v684 = vld [vmem:[%s10 + $0x10] sm:$0xf]
    %v685 = vld [vmem:[%s10 + $0x14] sm:$0xf]
    %v686 = vld [vmem:[%s10 + $0x18] sm:$0xf]
    %v687 = vld [vmem:[%s10 + $0x1c] sm:$0xf]
    %v688 = vld [vmem:[%s11] sm:$0x1]
    %v690 = vlaneseq
    %v691 = vshrl.u32 %v690, 7
    %v692 = vsub.s32 0, %v691
    %v693 = vrot.slane %v688, %v692
    %v703 = vunpack.c.l.b16 %v680
    %v704 = vunpack.c.l.b16 %v681
    %v705 = vunpack.c.l.b16 %v682
    %v706 = vunpack.c.l.b16 %v683
    %v707 = vunpack.c.l.b16 %v684
    %v708 = vunpack.c.l.b16 %v685
    %v709 = vunpack.c.l.b16 %v686
    %v710 = vunpack.c.l.b16 %v687
    %v711 = vpack.c.b16 %v704, %v703
    %v712 = vpack.c.b16 %v706, %v705
    %v713 = vpack.c.b16 %v708, %v707
    %v714 = vpack.c.b16 %v710, %v709
    %v720 = vsel %vm418, %v678, 0
    %v723 = vsel %vm418, %v679, 0
    %725 = vmatprep.subr.bf16.mxu0 0
    %726 = vmatpush1.bf16.msra.mxu0 0
    %727 = vmatprep.subr.bf16.mxu0 0
    %728 = vmatpush1.bf16.msra.mxu0 0
    %729 = vmatprep.subr.bf16.mxu0 0
    %730 = vmatpush1.bf16.msra.mxu0 0
    %731 = vmatprep.subr.bf16.mxu0 0
    %732 = vmatpush1.bf16.msra.mxu0 0
    %733 = vmatprep.subr.bf16.mxu0 0
    %734 = vmatpush1.bf16.msra.mxu0 %v714
    %735 = vmatprep.subr.bf16.mxu0 0
    %736 = vmatpush1.bf16.msra.mxu0 %v713
    %737 = vmatprep.subr.bf16.mxu0 0
    %738 = vmatpush1.bf16.msra.mxu0 %v712
    %739 = vmatprep.subr.bf16.mxu0 0
    %740 = vmatpush1.bf16.msra.mxu0 %v711
    %741 = vmatprep.subr.bf16.mxu0 0
    %742 = vmatpush2.bf16.msra.mxu0 0
    %743 = vmatprep.subr.bf16.mxu0 0
    %744 = vmatpush2.bf16.msra.mxu0 0
    %745 = vmatprep.subr.bf16.mxu0 0
    %746 = vmatpush2.bf16.msra.mxu0 0
    %747 = vmatprep.subr.bf16.mxu0 0
    %748 = vmatpush2.bf16.msra.mxu0 0
    %749 = vmatprep.subr.bf16.mxu0 0
    %750 = vmatpush2.bf16.msra.mxu0 0
    %751 = vmatprep.subr.bf16.mxu0 0
    %752 = vmatpush2.bf16.msra.mxu0 0
    %753 = vmatprep.subr.bf16.mxu0 0
    %754 = vmatpush2.bf16.msra.mxu0 0
    %755 = vmatprep.subr.bf16.mxu0 0
    %756 = vmatpush2.bf16.msra.mxu0 0
    %757 = vmatprep.mubr.bf16.mxu0 0
    %758 = vmatmul.mubr.bf16.gmra.mxu0 %v720
    %v759 = vpop.f32.mrf.mxu0
    %v760 = vadd.f32 %v693, %v759
    %v761 = vpop.f32.mrf.mxu0
    %v762 = vpop.f32.mrf.mxu0
    %v763 = vadd.f32 %v693, %v762
    %v764 = vpop.f32.mrf.mxu0
    %765 = vmatprep.mubr.bf16.mxu0 0
    %766 = vmatmul.mubr.bf16.gmra.mxu0 %v723
    %v767 = vpop.f32.mrf.mxu0
    %v768 = vadd.f32 %v693, %v767
    %v769 = vpop.f32.mrf.mxu0
    %v770 = vpop.f32.mrf.mxu0
    %v771 = vadd.f32 %v693, %v770
    %v772 = vpop.f32.mrf.mxu0
    %773 = vdwg.mxu0
    %v774 = vmax.f32 %v760, 0.0
    %v775 = vmax.f32 %v763, 0.0
    %v776 = vmax.f32 %v768, 0.0
    %v777 = vmax.f32 %v771, 0.0
    %v778 = vpack.c.bf16 %v775, %v774
    %v779 = vpack.c.bf16 %v777, %v776
    %v780 = vld [vmem:[%s12] sm:$0xff]
    %v781 = vld [vmem:[%s12 + $0x8] sm:$0xff]
    %v782 = vld [vmem:[%s12 + $0x10] sm:$0xff]
    %v783 = vld [vmem:[%s12 + $0x18] sm:$0xff]
    %v784 = vld [vmem:[%s12 + $0x20] sm:$0xff]
    %v785 = vld [vmem:[%s12 + $0x28] sm:$0xff]
    %v786 = vld [vmem:[%s12 + $0x30] sm:$0xff]
    %v787 = vld [vmem:[%s12 + $0x38] sm:$0xff]
    %v788 = vld [vmem:[%s12 + $0x40] sm:$0xff]
    %v789 = vld [vmem:[%s12 + $0x48] sm:$0xff]
    %v790 = vld [vmem:[%s12 + $0x50] sm:$0xff]
    %v791 = vld [vmem:[%s12 + $0x58] sm:$0xff]
    %v792 = vld [vmem:[%s12 + $0x60] sm:$0xff]
    %v793 = vld [vmem:[%s12 + $0x68] sm:$0xff]
    %v794 = vld [vmem:[%s12 + $0x70] sm:$0xff]
    %v795 = vld [vmem:[%s12 + $0x78] sm:$0xff]
    %v796 = vld [vmem:[%s13] sm:$0x3]
    %v798 = vlaneseq
    %v799 = vshrl.u32 %v798, 7
    %v800 = vsub.s32 0, %v799
    %v801 = vrot.slane %v796, %v800
    %v802 = vlaneseq
    %v803 = vshrl.u32 %v802, 7
    %v804 = vsub.s32 1, %v803
    %v805 = vrot.slane %v796, %v804
    %v824 = vunpack.c.l.b16 %v780
    %v825 = vunpack.c.h.b16 %v780
    %v826 = vunpack.c.l.b16 %v781
    %v827 = vunpack.c.h.b16 %v781
    %v828 = vunpack.c.l.b16 %v782
    %v829 = vunpack.c.h.b16 %v782
    %v830 = vunpack.c.l.b16 %v783
    %v831 = vunpack.c.h.b16 %v783
    %v832 = vunpack.c.l.b16 %v784
    %v833 = vunpack.c.h.b16 %v784
    %v834 = vunpack.c.l.b16 %v785
    %v835 = vunpack.c.h.b16 %v785
    %v836 = vunpack.c.l.b16 %v786
    %v837 = vunpack.c.h.b16 %v786
    %v838 = vunpack.c.l.b16 %v787
    %v839 = vunpack.c.h.b16 %v787
    %v840 = vunpack.c.l.b16 %v788
    %v841 = vunpack.c.h.b16 %v788
    %v842 = vunpack.c.l.b16 %v789
    %v843 = vunpack.c.h.b16 %v789
    %v844 = vunpack.c.l.b16 %v790
    %v845 = vunpack.c.h.b16 %v790
    %v846 = vunpack.c.l.b16 %v791
    %v847 = vunpack.c.h.b16 %v791
    %v848 = vunpack.c.l.b16 %v792
    %v849 = vunpack.c.h.b16 %v792
    %v850 = vunpack.c.l.b16 %v793
    %v851 = vunpack.c.h.b16 %v793
    %v852 = vunpack.c.l.b16 %v794
    %v853 = vunpack.c.h.b16 %v794
    %v854 = vunpack.c.l.b16 %v795
    %v855 = vunpack.c.h.b16 %v795
    %v856 = vpack.c.b16 %v826, %v824
    %v857 = vpack.c.b16 %v827, %v825
    %v858 = vpack.c.b16 %v830, %v828
    %v859 = vpack.c.b16 %v831, %v829
    %v860 = vpack.c.b16 %v834, %v832
    %v861 = vpack.c.b16 %v835, %v833
    %v862 = vpack.c.b16 %v838, %v836
    %v863 = vpack.c.b16 %v839, %v837
    %v864 = vpack.c.b16 %v842, %v840
    %v865 = vpack.c.b16 %v843, %v841
    %v866 = vpack.c.b16 %v846, %v844
    %v867 = vpack.c.b16 %v847, %v845
    %v868 = vpack.c.b16 %v850, %v848
    %v869 = vpack.c.b16 %v851, %v849
    %v870 = vpack.c.b16 %v854, %v852
    %v871 = vpack.c.b16 %v855, %v853
    %888 = vmatprep.subr.bf16.mxu0 %v871
    %889 = vmatpush1.bf16.msra.mxu0 %v870
    %890 = vmatprep.subr.bf16.mxu0 %v869
    %891 = vmatpush1.bf16.msra.mxu0 %v868
    %892 = vmatprep.subr.bf16.mxu0 %v867
    %893 = vmatpush1.bf16.msra.mxu0 %v866
    %894 = vmatprep.subr.bf16.mxu0 %v865
    %895 = vmatpush1.bf16.msra.mxu0 %v864
    %896 = vmatprep.subr.bf16.mxu0 %v863
    %897 = vmatpush1.bf16.msra.mxu0 %v862
    %898 = vmatprep.subr.bf16.mxu0 %v861
    %899 = vmatpush1.bf16.msra.mxu0 %v860
    %900 = vmatprep.subr.bf16.mxu0 %v859
    %901 = vmatpush1.bf16.msra.mxu0 %v858
    %902 = vmatprep.subr.bf16.mxu0 %v857
    %903 = vmatpush1.bf16.msra.mxu0 %v856
    %904 = vmatprep.subr.bf16.mxu0 0
    %905 = vmatpush2.bf16.msra.mxu0 0
    %906 = vmatprep.subr.bf16.mxu0 0
    %907 = vmatpush2.bf16.msra.mxu0 0
    %908 = vmatprep.subr.bf16.mxu0 0
    %909 = vmatpush2.bf16.msra.mxu0 0
    %910 = vmatprep.subr.bf16.mxu0 0
    %911 = vmatpush2.bf16.msra.mxu0 0
    %912 = vmatprep.subr.bf16.mxu0 0
    %913 = vmatpush2.bf16.msra.mxu0 0
    %914 = vmatprep.subr.bf16.mxu0 0
    %915 = vmatpush2.bf16.msra.mxu0 0
    %916 = vmatprep.subr.bf16.mxu0 0
    %917 = vmatpush2.bf16.msra.mxu0 0
    %918 = vmatprep.subr.bf16.mxu0 0
    %919 = vmatpush2.bf16.msra.mxu0 0
    %920 = vmatprep.mubr.bf16.mxu0 0
    %921 = vmatmul.mubr.bf16.gmra.mxu0 %v778
    %v922 = vpop.f32.mrf.mxu0
    %v923 = vadd.f32 %v801, %v922
    %v924 = vpop.f32.mrf.mxu0
    %v925 = vadd.f32 %v805, %v924
    %v926 = vpop.f32.mrf.mxu0
    %v927 = vadd.f32 %v801, %v926
    %v928 = vpop.f32.mrf.mxu0
    %v929 = vadd.f32 %v805, %v928
    %930 = vmatprep.mubr.bf16.mxu0 0
    %931 = vmatmul.mubr.bf16.gmra.mxu0 %v779
    %v932 = vpop.f32.mrf.mxu0
    %v933 = vadd.f32 %v801, %v932
    %v934 = vpop.f32.mrf.mxu0
    %v935 = vadd.f32 %v805, %v934
    %v936 = vpop.f32.mrf.mxu0
    %v937 = vadd.f32 %v801, %v936
    %v938 = vpop.f32.mrf.mxu0
    %v939 = vadd.f32 %v805, %v938
    %940 = vdwg.mxu0
    %v941 = vxor.u32 %v923, 2147483648
    %v942 = vxor.u32 %v925, 2147483648
    %v943 = vxor.u32 %v927, 2147483648
    %v944 = vxor.u32 %v929, 2147483648
    %v945 = vxor.u32 %v933, 2147483648
    %v946 = vxor.u32 %v935, 2147483648
    %v947 = vxor.u32 %v937, 2147483648
    %v948 = vxor.u32 %v939, 2147483648
    %v949 = vmul.f32 %v941, 1.442695
    %v950 = vpow.pop %v949
    %v951 = vmul.f32 %v942, 1.442695
    %v952 = vpow.pop %v951
    %v953 = vmul.f32 %v943, 1.442695
    %v954 = vpow.pop %v953
    %v955 = vmul.f32 %v944, 1.442695
    %v956 = vpow.pop %v955
    %v957 = vmul.f32 %v945, 1.442695
    %v958 = vpow.pop %v957
    %v959 = vmul.f32 %v946, 1.442695
    %v960 = vpow.pop %v959
    %v961 = vmul.f32 %v947, 1.442695
    %v962 = vpow.pop %v961
    %v963 = vmul.f32 %v948, 1.442695
    %v964 = vpow.pop %v963
    %v965 = vadd.f32 %v950, 1.0
    %v966 = vadd.f32 %v952, 1.0
    %v967 = vadd.f32 %v954, 1.0
    %v968 = vadd.f32 %v956, 1.0
    %v969 = vadd.f32 %v958, 1.0
    %v970 = vadd.f32 %v960, 1.0
    %v971 = vadd.f32 %v962, 1.0
    %v972 = vadd.f32 %v964, 1.0
    %v973 = vrcp.pop %v965
    %v974 = vmul.f32 1.0, %v973
    %v975 = vrcp.pop %v966
    %v976 = vmul.f32 1.0, %v975
    %v977 = vrcp.pop %v967
    %v978 = vmul.f32 1.0, %v977
    %v979 = vrcp.pop %v968
    %v980 = vmul.f32 1.0, %v979
    %v981 = vrcp.pop %v969
    %v982 = vmul.f32 1.0, %v981
    %v983 = vrcp.pop %v970
    %v984 = vmul.f32 1.0, %v983
    %v985 = vrcp.pop %v971
    %v986 = vmul.f32 1.0, %v985
    %v987 = vrcp.pop %v972
    %v988 = vmul.f32 1.0, %v987
    %v989 = vpack.c.bf16 %v978, %v974
    %v990 = vpack.c.bf16 %v980, %v976
    %v991 = vpack.c.bf16 %v986, %v982
    %v992 = vpack.c.bf16 %v988, %v984
    %v997 = vunpack.c.l.b16 %v989
    %v998 = vunpack.c.l.b16 %v990
    %v999 = vunpack.c.h.b16 %v989
    %v1000 = vunpack.c.h.b16 %v990
    %v1001 = vunpack.c.l.b16 %v991
    %v1002 = vunpack.c.l.b16 %v992
    %v1003 = vunpack.c.h.b16 %v991
    %v1004 = vunpack.c.h.b16 %v992
    %v1005 = vpack.c.b16 %v998, %v997
    %v1006 = vpack.c.b16 %v1000, %v999
    %v1007 = vpack.c.b16 %v1002, %v1001
    %v1008 = vpack.c.b16 %v1004, %v1003
    %1013 = vst [vmem:[#allocation2] sm:$0xff] %v1005
    %1014 = vst [vmem:[#allocation2 + $0x8] sm:$0xff] %v1006
    %1015 = vst [vmem:[#allocation2 + $0x10] sm:$0xff] %v1007
    %1016 = vst [vmem:[#allocation2 + $0x18] sm:$0xff] %v1008
    // Predicated region
    $region58: #{_vae_forward_impl.1} parent=1 // pred_check
      _
    $region59: #{_vae_forward_impl.1} parent=1 // pred_check_branch
      %1018 = sbr.rel (0) target = $region61
    $region60: #{_vae_forward_impl.1} parent=1 // pred_region
      _
    $region61: #{_vae_forward_impl.1} parent=1 // pred_fallthru
      _
    // Predicated region
    $region62: #{_vae_forward_impl.1} parent=1 // pred_check
      _
    $region63: #{_vae_forward_impl.1} parent=1 // pred_check_branch
      %1020 = sbr.rel (0) target = $region65
    $region64: #{_vae_forward_impl.1} parent=1 // pred_region
      %s1022 = ssub.s32 512, 512
      %1023 = vsyncadd [#allocation3], %s1022
      %s1024 = sshll.u32 [#allocation2], 4
      %s1025 = int_to_ptr.vmem [resolvable:$true] %s1024
      %1030 = dma.vmem_to_hbm [thread:$0]  %s1025, 512, %s15, [#allocation3], 128, 128, 8
    $region65: #{_vae_forward_impl.1} parent=1 // pred_fallthru
      _
    // Predicated region
    $region66: #{_vae_forward_impl.1} parent=1 // pred_check
      _
    $region67: #{_vae_forward_impl.1} parent=1 // pred_check_branch
      %1032 = sbr.rel (0) target = $region69
    $region68: #{_vae_forward_impl.1} parent=1 // pred_region
      _
    $region69: #{_vae_forward_impl.1} parent=1 // pred_fallthru
      _
    // Predicated region
    $region70: #{_vae_forward_impl.1} parent=1 // pred_check
      _
    $region71: #{_vae_forward_impl.1} parent=1 // pred_check_branch
      %1034 = sbr.rel (0) target = $region73
    $region72: #{_vae_forward_impl.1} parent=1 // pred_region
      %1035 = dma.done [#allocation3], 512
    $region73: #{_vae_forward_impl.1} parent=1 // pred_fallthru
      _
    %1036 = vsyncpa [#allocation3], 1

</llo_original>
